<compile_context>
chip_gen: v7x
topology: tpu7x:2x2x1
jax: 0.10.0
libtpu: 0.0.40
codegen_flags: <defaults>
</compile_context>

<pallas_src>
import math

import jax
import jax.numpy as jnp
from jax.experimental import pallas as pl
from jax.experimental.pallas import tpu as pltpu


def _round_up(x, m):
    return -(-x // m) * m


def _token_embedding_kernel(x_ref, w_ref, o_ref):
    # x_ref: (l_tile, K_pad) im2col rows; w_ref: (K_pad, d_pad) fused weight
    # (VMEM-resident); o_ref: (l_tile, d_pad).  One MXU matmul, f32 accum.
    o_ref[...] = jnp.dot(x_ref[...], w_ref[...],
                         preferred_element_type=jnp.float32).astype(o_ref.dtype)


def _build_fused_weight(weights, pads, p_max, c_in, k_pad, d_pad, dtype):
    """Scatter every branch's taps into one (k_pad, d_pad) matrix.

    weights[i] has shape (k_i, c_in, oc_i) (transposed Conv1d weight).
    Tap j of a branch with padding p lands at window offset kappa = p_max-p+j,
    reproducing that branch's circular-padding alignment.  Rows >= kw*c_in and
    columns >= sum(oc_i) stay zero (pure lane/sublane alignment padding).
    """
    w_fused = jnp.zeros((k_pad, d_pad), dtype)
    o_off = 0
    for w, p in zip(weights, pads):
        k, c, oc = w.shape
        assert c == c_in
        for j in range(k):
            kappa = p_max - p + j
            w_fused = w_fused.at[kappa * c_in:(kappa + 1) * c_in,
                                 o_off:o_off + oc].set(w[j].astype(dtype))
        o_off += oc
    return w_fused


def token_embedding(x, weights, *, l_tile=None):
    """TokenEmbedding forward.

    x: (B, L, c_in); weights: list of arrays (kernel_size_i, c_in, out_ch_i)
    (transposed Conv1d weights, all odd kernel sizes).  Returns
    (B, L, sum(out_ch_i)) in x.dtype.  Pass bf16 x (and weights) for the fast
    path: bf16 operands + output, f32 accumulation (expect ~bf16 tolerance).
    """
    B, L, C = x.shape
    # Derive each branch's circular padding from its own kernel size.
    ksizes = [int(w.shape[0]) for w in weights]
    assert all(k % 2 == 1 for k in ksizes), \
        "all kernel sizes must be odd so every branch preserves length L"
    pads = [(k - 1) // 2 for k in ksizes]
    p_max = max(pads)
    assert L >= p_max, "single-wrap circular padding requires L >= max padding"
    kw = 2 * p_max + 1
    d_out = sum(int(w.shape[2]) for w in weights)

    # Lane-dense padded operand / output widths.
    k_feat = kw * C
    k_pad = 64 if k_feat <= 64 else _round_up(k_feat, 128)
    d_pad = _round_up(d_out, 128)

    # --- sequence tiling -----------------------------------------------------
    if l_tile is None:
        l_tile = min(_round_up(L, 8), 1024)       # big tiles amortize step cost
        if B == 1 and L > 8 and -(-L // l_tile) < 2:
            l_tile = _round_up(-(-L // 2), 8)     # keep both v7x cores busy
    l_tile = max(8, _round_up(int(l_tile), 8))
    n_tiles = -(-L // l_tile)
    l_padded = n_tiles * l_tile

    # --- wrapper glue: circular pad once, im2col via shifted slices ----------
    xpad = jnp.concatenate([x[:, L - p_max:, :], x, x[:, :p_max, :]], axis=1)
    if l_padded > L:                              # zero tail; rows >= L sliced off
        xpad = jnp.concatenate(
            [xpad, jnp.zeros((B, l_padded - L, C), xpad.dtype)], axis=1)
    # Row t gathers taps t .. t+kw-1 over all C channels (lane order kappa*C+c),
    # then the feature dim is zero-padded up to k_pad lanes.
    cols = [xpad[:, kappa:kappa + l_padded, :] for kappa in range(kw)]
    if k_pad > k_feat:
        cols.append(jnp.zeros((B, l_padded, k_pad - k_feat), xpad.dtype))
    x_win = jnp.concatenate(cols, axis=-1).reshape(B, n_tiles, l_tile, k_pad)

    w_fused = _build_fused_weight(weights, pads, p_max, C, k_pad, d_pad, x.dtype)

    flops = 2 * B * l_padded * k_pad * d_pad
    bytes_accessed = (x_win.size * x_win.dtype.itemsize
                      + w_fused.size * w_fused.dtype.itemsize
                      + B * l_padded * d_pad * x.dtype.itemsize)

    out = pl.pallas_call(
        _token_embedding_kernel,
        out_shape=jax.ShapeDtypeStruct((B, l_padded, d_pad), x.dtype),
        grid=(B, n_tiles),
        in_specs=[
            pl.BlockSpec((pl.Squeezed(), pl.Squeezed(), l_tile, k_pad),
                         lambda b, j: (b, j, 0, 0)),
            pl.BlockSpec((k_pad, d_pad), lambda b, j: (0, 0)),  # VMEM-resident
        ],
        out_specs=pl.BlockSpec((pl.Squeezed(), l_tile, d_pad),
                               lambda b, j: (b, j, 0)),
        compiler_params=pltpu.CompilerParams(
            dimension_semantics=("parallel", "parallel")),
        cost_estimate=pl.CostEstimate(flops=flops, transcendentals=0,
                                      bytes_accessed=bytes_accessed),
    )(x_win, w_fused)
    return out[:, :L, :d_out]


def make_weights(key, c_in, d_model):
    """Deterministic kaiming-normal(fan_in, leaky_relu) init, PyTorch layout
    (out_ch, c_in, k), transposed to (k, c_in, out_ch) for the wrapper."""
    specs = [
        (d_model // 8, 1),
        (d_model // 8, 3),
        (d_model // 8, 5),
        (d_model // 8, 7),
        (d_model // 2, c_in),
    ]
    weights = []
    for i, (oc, k) in enumerate(specs):
        fan_in = c_in * k
        std = math.sqrt(2.0) / math.sqrt(fan_in)  # gain(leaky_relu, a=0)=sqrt(2)
        w = std * jax.random.normal(jax.random.fold_in(key, i),
                                    (oc, c_in, k), dtype=jnp.float32)
        weights.append(jnp.transpose(w, (2, 1, 0)))  # -> (k, c_in, oc)
    return weights


def _reference(x, weights):
    """Pure-JAX f32 reference of the circular Conv1d bank (roll formulation)."""
    outs = []
    for w in weights:
        k = int(w.shape[0])
        p = (k - 1) // 2
        acc = 0.0
        for j in range(k):
            xs = jnp.roll(x, shift=p - j, axis=1)   # x[(t + j - p) mod L]
            acc = acc + jnp.einsum("blc,co->blo", xs.astype(jnp.float32),
                                   w[j].astype(jnp.float32))
        outs.append(acc)
    return jnp.concatenate(outs, axis=-1)


if __name__ == "__main__":
    # Small shapes: c_in odd so every branch keeps length L; L chosen so the
    # kernel exercises the multi-tile path (l_tile=8 -> 3 sequence tiles).
    B, L, c_in, d_model = 2, 24, 7, 32

    key = jax.random.PRNGKey(0)
    kx, kw_key = jax.random.split(key)
    x = jax.random.normal(kx, (B, L, c_in), dtype=jnp.float32)
    weights = make_weights(kw_key, c_in, d_model)

    # f32 path + strict correctness check against the pure-JAX reference.
    out = jax.block_until_ready(token_embedding(x, weights, l_tile=8))
    ref = _reference(x, weights)
    assert out.shape == (B, L, d_model), out.shape
    assert jnp.allclose(out, ref, atol=5e-4, rtol=5e-4), "mismatch vs reference (f32)"

    # bf16 fast path (half HBM writeback, full-rate MXU); bf16-level tolerance.
    out_bf16 = jax.block_until_ready(
        token_embedding(x.astype(jnp.bfloat16),
                        [w.astype(jnp.bfloat16) for w in weights], l_tile=8))
    assert out_bf16.dtype == jnp.bfloat16
    assert jnp.allclose(out_bf16.astype(jnp.float32), ref,
                        atol=1e-1, rtol=1e-1), "mismatch vs reference (bf16)"

    print("KERNEL_OK")
</pallas_src>

<mosaic_0001>
module attributes {stable_mosaic.version = 11 : i64} {
  func.func @_token_embedding_kernel(%arg0: i32, %arg1: i32, %arg2: memref<1x1x8x64xf32, #tpu.memory_space<vmem>>, %arg3: memref<64x128xf32, #tpu.memory_space<vmem>>, %arg4: memref<1x8x128xf32, #tpu.memory_space<vmem>>) attributes {dimension_semantics = [#tpu.dimension_semantics<parallel>, #tpu.dimension_semantics<parallel>], iteration_bounds = array<i64: 2, 3>, scalar_prefetch = 0 : i64, scratch_operands = 0 : i64, tpu.core_type = #tpu.core_type<tc>, window_params = [{transform_indices = @transform_0, window_bounds = array<i64: 1, 1, 8, 64>}, {pipeline_mode = #tpu.pipeline_mode<synchronous>, transform_indices = @transform_1, window_bounds = array<i64: 64, 128>}, {transform_indices = @transform_2, window_bounds = array<i64: 1, 8, 128>}]} {
    %c0 = arith.constant 0 : index
    %c0_0 = arith.constant 0 : index
    %c0_1 = arith.constant 0 : index
    %c0_2 = arith.constant 0 : index
    %0 = vector.load %arg2[%c0, %c0_0, %c0_1, %c0_2] : memref<1x1x8x64xf32, #tpu.memory_space<vmem>>, vector<1x1x8x64xf32>
    %1 = vector.shape_cast %0 : vector<1x1x8x64xf32> to vector<8x64xf32>
    %c0_3 = arith.constant 0 : index
    %c0_4 = arith.constant 0 : index
    %2 = vector.load %arg3[%c0_3, %c0_4] : memref<64x128xf32, #tpu.memory_space<vmem>>, vector<64x128xf32>
    %cst = arith.constant dense<0.000000e+00> : vector<8x128xf32>
    %3 = tpu.matmul %1, %2, %cst {dimension_numbers = #tpu.dot_dimension_numbers<[1], [0], [0], [1], [0, 0, 1, 1], [], []>} : vector<8x64xf32>, vector<64x128xf32>, vector<8x128xf32> -> vector<8x128xf32>
    %c0_5 = arith.constant 0 : index
    %c0_6 = arith.constant 0 : index
    %c0_7 = arith.constant 0 : index
    %4 = vector.load %arg4[%c0_5, %c0_6, %c0_7] : memref<1x8x128xf32, #tpu.memory_space<vmem>>, vector<1x8x128xf32>
    %5 = vector.shape_cast %4 : vector<1x8x128xf32> to vector<8x128xf32>
    %6 = vector.shape_cast %3 : vector<8x128xf32> to vector<1x8x128xf32>
    tpu.vector_store %arg4[%c0_5, %c0_6, %c0_7], %6 {strides = array<i32>} : memref<1x8x128xf32, #tpu.memory_space<vmem>>, vector<1x8x128xf32>,
    return
  }
  func.func @transform_0(%arg0: i32, %arg1: i32) -> (i32, i32, i32, i32) {
    %c0_i32 = arith.constant 0 : i32
    %c0_i32_0 = arith.constant 0 : i32
    %c0_i32_1 = arith.constant 0 : i32
    return %arg0, %arg1, %c0_i32, %c0_i32_0 : i32, i32, i32, i32
  }
  func.func @transform_1(%arg0: i32, %arg1: i32) -> (i32, i32) {
    %c0_i32 = arith.constant 0 : i32
    %c0_i32_0 = arith.constant 0 : i32
    %c0_i32_1 = arith.constant 0 : i32
    return %c0_i32, %c0_i32_0 : i32, i32
  }
  func.func @transform_2(%arg0: i32, %arg1: i32) -> (i32, i32, i32) {
    %c0_i32 = arith.constant 0 : i32
    %c0_i32_0 = arith.constant 0 : i32
    return %arg0, %arg1, %c0_i32 : i32, i32, i32
  }
}

</mosaic_0001>

<llo_original>
// kernel: tpu_custom_call.1
$region0: #{tpu_custom_call.1}
  #allocation0 [shape = 'u32[]', space=smem, size = 0x4, offset = 0x4, fixed_abs, tag = 'smem constant byte address 0x4 - core index']
  #allocation1 [shape = 'u32[144,128]{1,0:T(1,128)}', space=vmem, size = 0x12000, scoped, tag = 'internal scratch']
  %s0 = inlined_call_operand.hbm [shape: f32[2,3,8,64], index: 0, kind: input, shape index: {}]
  %s1 = inlined_call_operand.hbm [shape: f32[64,128], index: 1, kind: input, shape index: {}]
  %s2 = inlined_call_operand.hbm [shape: f32[2,24,128], index: 2, kind: output, shape index: {}]
  %s3 = sld [smem:[#allocation0]]
  $region49: #{tpu_custom_call.1} parent=0
    _
  %s5 = ssub.s32 1, %s3
  %s6 = scalar_select 0, %s5, %s3
  $region1: #{tpu_custom_call.1} parent=0
    #allocation2 [shape = 'u8[8192]{0}', space=vmem, size = 0x2000, scoped, tag = 'input window, operand 0']
    #allocation3 [shape = 's32[2]{0}', space=sflag, size = 0x8, scoped, tag = 'scoped memory for tpu_custom_call.1']
    #allocation4 [shape = 's32[2]{0}', space=sflag, size = 0x8, scoped, tag = 'scoped memory for tpu_custom_call.1']
    #allocation5 [shape = 'u8[32768]{0}', space=vmem, size = 0x8000, scoped, tag = 'input window, operand 1, single buffered']
    #allocation6 [shape = 's32[1]{0}', space=sflag, size = 0x4, scoped, tag = 'scoped memory for tpu_custom_call.1']
    #allocation7 [shape = 'u8[8192]{0}', space=vmem, size = 0x2000, scoped, tag = 'output window, operand 0']
    %7 = vsyncpa [#allocation3], 0
    %s8 = scalar_lea.sflag [#allocation3], 1
    %9 = vsyncpa %s8, 0
    %10 = vsyncpa [#allocation6], 0
    %11 = vsyncpa [#allocation4], 0
    %s12 = scalar_lea.sflag [#allocation4], 1
    %13 = vsyncpa %s12, 0
    loop: start=0, step=1, limit=8
    $region2: #{tpu_custom_call.1} parent=1 // loop_pre_header
      _
    $region3: #{tpu_custom_call.1} parent=1 // loop_header
      %s15 = sphi 0, %s19
      %p16 = scmp.ge.s32.totalorder %s15, 8
      %s22 = sphi 0, %s34
      %s23 = sphi 0, %s30
      %s24 = sphi 0, %s22
      %s25 = sphi 0, %s23
      %s26 = sphi 0, %s24
      %s27 = sphi 0, %s25
      %s39 = sphi 0, %s41
      %s42 = sphi 0, %s39
      %s43 = sphi 0, %s42
      %s59 = sphi 0, %s43
      %s63 = sphi 0, %s63
      %s65 = sphi 0, %s63
      %s66 = sphi 0, %s65
      %s80 = sphi 0, %s66
      %s88 = sphi 0, %s90
      %s91 = sphi 0, %s88
      %s92 = sphi 0, %s91
      %s108 = sphi 0, %s92
    $region4: #{tpu_custom_call.1} parent=1 // loop_header_branch
      %18 = sbr.rel (%p16) target = $region8
    $region5: #{tpu_custom_call.1} parent=1 // loop_body
      %s20 = ssub.s32 %s15, 1
      %s21 = ssub.s32 %s15, 2
      %s28 = sadd.s32 1, %s23
      %p29 = scmp.ge.s32.totalorder %s28, 3
      %s30 = scalar_select %p29, 0, %s28
      %s31 = sadd.s32 1, %s22
      %s32 = scalar_select %p29, %s31, %s22
      %p33 = scmp.ge.s32.totalorder %s32, 2
      %s34 = scalar_select %p33, 0, %s32
      %s35 = ssub.s32 %s22, %s34
      %s36 = ssub.s32 %s23, %s30
      %s37 = sor.u32 %s35, %s36
      %p38 = scmp.eq.s32.totalorder %s37, 0
      %s40 = sadd.s32 %s39, 1
      %s41 = scalar_select %p38, %s39, %s40
      %p44 = pneg %p38
      %p45 = scmp.eq.s32.totalorder %s15, 5
      %p46 = por %p44, %p45
      %p47 = scmp.ne.s32.totalorder %s39, %s42
      %p48 = scmp.eq.s32.totalorder %s15, 0
      %p49 = por %p47, %p48
      %p50 = scmp.ne.s32.totalorder %s39, %s42
      %p51 = scmp.eq.s32.totalorder %s20, 5
      %p52 = por %p50, %p51
      %p53 = scmp.ne.s32.totalorder %s42, %s43
      %p54 = scmp.eq.s32.totalorder %s20, 0
      %p55 = por %p53, %p54
      %p56 = scmp.ne.s32.totalorder %s42, %s43
      %p57 = scmp.eq.s32.totalorder %s21, 5
      %p58 = por %p56, %p57
      %p60 = scmp.ne.s32.totalorder %s43, %s59
      %p61 = scmp.eq.s32.totalorder %s21, 0
      %p62 = por %p60, %p61
      %s64 = sadd.s32 %s63, 1
      %p67 = scmp.eq.s32.totalorder %s15, 5
      %p68 = scmp.ne.s32.totalorder %s63, %s65
      %p69 = scmp.eq.s32.totalorder %s15, 0
      %p70 = por %p68, %p69
      %p71 = scmp.ne.s32.totalorder %s63, %s65
      %p72 = scmp.eq.s32.totalorder %s20, 5
      %p73 = por %p71, %p72
      %p74 = scmp.ne.s32.totalorder %s65, %s66
      %p75 = scmp.eq.s32.totalorder %s20, 0
      %p76 = por %p74, %p75
      %p77 = scmp.ne.s32.totalorder %s65, %s66
      %p78 = scmp.eq.s32.totalorder %s21, 5
      %p79 = por %p77, %p78
      %p81 = scmp.ne.s32.totalorder %s66, %s80
      %p82 = scmp.eq.s32.totalorder %s21, 0
      %p83 = por %p81, %p82
      %s84 = ssub.s32 %s22, %s34
      %s85 = ssub.s32 %s23, %s30
      %s86 = sor.u32 %s84, %s85
      %p87 = scmp.eq.s32.totalorder %s86, 0
      %s89 = sadd.s32 %s88, 1
      %s90 = scalar_select %p87, %s88, %s89
      %p93 = pneg %p87
      %p94 = scmp.eq.s32.totalorder %s15, 5
      %p95 = por %p93, %p94
      %p96 = scmp.ne.s32.totalorder %s88, %s91
      %p97 = scmp.eq.s32.totalorder %s15, 0
      %p98 = por %p96, %p97
      %p99 = scmp.ne.s32.totalorder %s88, %s91
      %p100 = scmp.eq.s32.totalorder %s20, 5
      %p101 = por %p99, %p100
      %p102 = scmp.ne.s32.totalorder %s91, %s92
      %p103 = scmp.eq.s32.totalorder %s20, 0
      %p104 = por %p102, %p103
      %p105 = scmp.ne.s32.totalorder %s91, %s92
      %p106 = scmp.eq.s32.totalorder %s21, 5
      %p107 = por %p105, %p106
      %p109 = scmp.ne.s32.totalorder %s92, %s108
      %p110 = scmp.eq.s32.totalorder %s21, 0
      %p111 = por %p109, %p110
      %p112 = scmp.le.s32.totalorder 1, %s15
      %p113 = scmp.lt.s32.totalorder %s15, 7
      %p114 = pnand %p112, %p113
      %p115 = pneg %p114
      // Predicated region
      $region9: #{tpu_custom_call.1} parent=5 // pred_check
        _
      $region10: #{tpu_custom_call.1} parent=5 // pred_check_branch
        %117 = sbr.rel (%p114) target = $region12
      $region11: #{tpu_custom_call.1} parent=5 // pred_region
        %s118 = ssub.s32 %s15, 1
        // Predicated region
        $region13: #{tpu_custom_call.1} parent=11 // pred_check
          %p119 = pneg %p76
        $region14: #{tpu_custom_call.1} parent=11 // pred_check_branch
          %121 = sbr.rel (%p119) target = $region16
        $region15: #{tpu_custom_call.1} parent=11 // pred_region
          %s123 = ssub.s32 1024, 1024
          %124 = vsyncadd [#allocation6], %s123
          %s125 = sshll.u32 [#allocation5], 4
          %s126 = int_to_ptr.vmem [resolvable:$true] %s125
          %131 = dma.hbm_to_vmem [thread:$0]  %s1, 1024, %s126, [#allocation6], 128, 128, 8
        $region16: #{tpu_custom_call.1} parent=11 // pred_fallthru
          _
      $region12: #{tpu_custom_call.1} parent=5 // pred_fallthru
        _
      %p132 = scmp.lt.s32.totalorder %s15, 6
      // Predicated region
      $region17: #{tpu_custom_call.1} parent=5 // pred_check
        %p133 = pneg %p132
      $region18: #{tpu_custom_call.1} parent=5 // pred_check_branch
        %135 = sbr.rel (%p133) target = $region20
      $region19: #{tpu_custom_call.1} parent=5 // pred_region
        // Predicated region
        $region21: #{tpu_custom_call.1} parent=19 // pred_check
          %p136 = pneg %p49
        $region22: #{tpu_custom_call.1} parent=19 // pred_check_branch
          %138 = sbr.rel (%p136) target = $region24
        $region23: #{tpu_custom_call.1} parent=19 // pred_region
          %s139 = sand.u32 %s39, 1
          %s140 = scalar_lea.sflag [#allocation3], %s139
          %s141 = sand.u32 %s39, 1
          %s142 = smul.addr %s141, 8
          %s143 = scalar_lea.vmem [#allocation2], %s142
          %s145 = ssub.s32 128, 128
          %146 = vsyncadd %s140, %s145
          %s147 = smul.addr %s22, 3
          %s148 = sadd.s32 %s23, %s147
          %s149 = smul.addr %s148, 128
          %s150 = scalar_lea.hbm %s0, %s149
          %s152 = sshll.u32 %s143, 4
          %s153 = int_to_ptr.vmem [resolvable:$true] %s152
          %155 = dma.hbm_to_vmem [thread:$0]  %s150, 128, %s153, %s140
        $region24: #{tpu_custom_call.1} parent=19 // pred_fallthru
          _
      $region20: #{tpu_custom_call.1} parent=5 // pred_fallthru
        _
      %p156 = scmp.le.s32.totalorder 1, %s15
      %p157 = scmp.lt.s32.totalorder %s15, 7
      %p158 = pnand %p156, %p157
      %p159 = pneg %p158
      // Predicated region
      $region25: #{tpu_custom_call.1} parent=5 // pred_check
        _
      $region26: #{tpu_custom_call.1} parent=5 // pred_check_branch
        %161 = sbr.rel (%p158) target = $region28
      $region27: #{tpu_custom_call.1} parent=5 // pred_region
        %s162 = ssub.s32 %s15, 1
        %s163 = sand.u32 %s42, 1
        %s164 = scalar_lea.sflag [#allocation3], %s163
        %s165 = sand.u32 %s42, 1
        %s166 = smul.addr %s165, 8
        %s167 = scalar_lea.vmem [#allocation2], %s166
        // Predicated region
        $region29: #{tpu_custom_call.1} parent=27 // pred_check
          %p168 = pneg %p55
        $region30: #{tpu_custom_call.1} parent=27 // pred_check_branch
          %170 = sbr.rel (%p168) target = $region32
        $region31: #{tpu_custom_call.1} parent=27 // pred_region
          %171 = dma.done %s164, 128
        $region32: #{tpu_custom_call.1} parent=27 // pred_fallthru
          _
        // Predicated region
        $region33: #{tpu_custom_call.1} parent=27 // pred_check
          %p172 = pneg %p76
        $region34: #{tpu_custom_call.1} parent=27 // pred_check_branch
          %174 = sbr.rel (%p172) target = $region36
        $region35: #{tpu_custom_call.1} parent=27 // pred_region
          %175 = dma.done [#allocation6], 1024
        $region36: #{tpu_custom_call.1} parent=27 // pred_fallthru
          _
        %s176 = sand.u32 %s42, 1
        %s177 = scalar_lea.sflag [#allocation3], %s176
        %s178 = sand.u32 %s42, 1
        %s179 = smul.addr %s178, 8
        %s180 = scalar_lea.vmem [#allocation2], %s179
        %p181 = pneg %p55
        %p182 = pneg %p52
        %p183 = pneg %p76
        %p184 = pneg %p73
        %p185 = pneg %p104
        %p186 = pneg %p101
        %s187 = sand.u32 %s91, 1
        %s188 = scalar_lea.sflag [#allocation4], %s187
        %s189 = sand.u32 %s91, 1
        %s190 = smul.addr %s189, 8
        %s191 = scalar_lea.vmem [#allocation7], %s190
        %v192 = vld [vmem:[%s167] sm:$0xff]
        %v193 = vld [vmem:[#allocation5] sm:$0xff]
        %v194 = vld [vmem:[#allocation5 + $0x8] sm:$0xff]
        %v195 = vld [vmem:[#allocation5 + $0x10] sm:$0xff]
        %v196 = vld [vmem:[#allocation5 + $0x18] sm:$0xff]
        %v197 = vld [vmem:[#allocation5 + $0x20] sm:$0xff]
        %v198 = vld [vmem:[#allocation5 + $0x28] sm:$0xff]
        %v199 = vld [vmem:[#allocation5 + $0x30] sm:$0xff]
        %v200 = vld [vmem:[#allocation5 + $0x38] sm:$0xff]
        %vm201 = vcmask 523264
        %v203 = vsel %vm201, %v192, 0
        %205 = vmatprep.subr.mxu0 0.0
        %206 = vmatpush1.msra.mxu0 %v193
        %207 = vmatprep.subr.mxu0 0.0
        %208 = vmatpush1.msra.mxu0 %v194
        %209 = vmatprep.subr.mxu0 0.0
        %210 = vmatpush1.msra.mxu0 %v195
        %211 = vmatprep.subr.mxu0 0.0
        %212 = vmatpush1.msra.mxu0 %v196
        %213 = vmatprep.subr.mxu0 0.0
        %214 = vmatpush1.msra.mxu0 %v197
        %215 = vmatprep.subr.mxu0 0.0
        %216 = vmatpush1.msra.mxu0 %v198
        %217 = vmatprep.subr.mxu0 0.0
        %218 = vmatpush1.msra.mxu0 %v199
        %219 = vmatprep.subr.mxu0 0.0
        %220 = vmatpush1.msra.mxu0 %v200
        %221 = vmatprep.subr.mxu0 0.0
        %222 = vmatpush1.msra.mxu0 0.0
        %223 = vmatprep.subr.mxu0 0.0
        %224 = vmatpush1.msra.mxu0 0.0
        %225 = vmatprep.subr.mxu0 0.0
        %226 = vmatpush1.msra.mxu0 0.0
        %227 = vmatprep.subr.mxu0 0.0
        %228 = vmatpush1.msra.mxu0 0.0
        %229 = vmatprep.subr.mxu0 0.0
        %230 = vmatpush1.msra.mxu0 0.0
        %231 = vmatprep.subr.mxu0 0.0
        %232 = vmatpush1.msra.mxu0 0.0
        %233 = vmatprep.subr.mxu0 0.0
        %234 = vmatpush1.msra.mxu0 0.0
        %235 = vmatprep.subr.mxu0 0.0
        %236 = vmatpush1.msra.mxu0 0.0
        %237 = vmatprep.subr.mxu0 0.0
        %238 = vmatpush1.msra.mxu0 0.0
        %239 = vmatprep.subr.mxu0 0.0
        %240 = vmatpush1.msra.mxu0 0.0
        %241 = vmatprep.subr.mxu0 0.0
        %242 = vmatpush1.msra.mxu0 0.0
        %243 = vmatprep.subr.mxu0 0.0
        %244 = vmatpush1.msra.mxu0 0.0
        %245 = vmatprep.subr.mxu0 0.0
        %246 = vmatpush1.msra.mxu0 0.0
        %247 = vmatprep.subr.mxu0 0.0
        %248 = vmatpush1.msra.mxu0 0.0
        %249 = vmatprep.subr.mxu0 0.0
        %250 = vmatpush1.msra.mxu0 0.0
        %251 = vmatprep.subr.mxu0 0.0
        %252 = vmatpush1.msra.mxu0 0.0
        %253 = vmatprep.subr.mxu0 0.0
        %254 = vmatpush1.msra.mxu0 0.0
        %255 = vmatprep.subr.mxu0 0.0
        %256 = vmatpush1.msra.mxu0 0.0
        %257 = vmatprep.subr.mxu0 0.0
        %258 = vmatpush1.msra.mxu0 0.0
        %259 = vmatprep.subr.mxu0 0.0
        %260 = vmatpush1.msra.mxu0 0.0
        %261 = vmatprep.subr.mxu0 0.0
        %262 = vmatpush1.msra.mxu0 0.0
        %263 = vmatprep.subr.mxu0 0.0
        %264 = vmatpush1.msra.mxu0 0.0
        %265 = vmatprep.subr.mxu0 0.0
        %266 = vmatpush1.msra.mxu0 0.0
        %267 = vmatprep.subr.mxu0 0.0
        %268 = vmatpush1.msra.mxu0 0.0
        %269 = vmatprep.mubr.f32.mxu0 0.0
        %270 = vmatmul.mubr.f32.gmra.mrb[0].mxu0 %v203
        %v271 = vpop.f32.mrb[0].mxu0
        %v272 = vadd.f32 0.0, %v271
        %v273 = vpop.f32.mrb[0].mxu0
        %274 = vdwg.mxu0
        %275 = vst [vmem:[%s191] sm:$0xff] %v272
        %s276 = sand.u32 %s91, 1
        %s277 = scalar_lea.sflag [#allocation4], %s276
        %s278 = sand.u32 %s91, 1
        %s279 = smul.addr %s278, 8
        %s280 = scalar_lea.vmem [#allocation7], %s279
        // Predicated region
        $region37: #{tpu_custom_call.1} parent=27 // pred_check
          %p281 = pneg %p101
        $region38: #{tpu_custom_call.1} parent=27 // pred_check_branch
          %283 = sbr.rel (%p281) target = $region40
        $region39: #{tpu_custom_call.1} parent=27 // pred_region
          %s285 = ssub.s32 128, 128
          %286 = vsyncadd %s277, %s285
          %s287 = smul.addr %s24, 3
          %s288 = sadd.s32 %s25, %s287
          %s289 = smul.addr %s288, 128
          %s290 = scalar_lea.hbm %s2, %s289
          %s292 = sshll.u32 %s280, 4
          %s293 = int_to_ptr.vmem [resolvable:$true] %s292
          %295 = dma.vmem_to_hbm [thread:$0]  %s293, 128, %s290, %s277
        $region40: #{tpu_custom_call.1} parent=27 // pred_fallthru
          _
      $region28: #{tpu_custom_call.1} parent=5 // pred_fallthru
        _
      %p296 = scmp.le.s32.totalorder 2, %s15
      // Predicated region
      $region41: #{tpu_custom_call.1} parent=5 // pred_check
        %p297 = pneg %p296
      $region42: #{tpu_custom_call.1} parent=5 // pred_check_branch
        %299 = sbr.rel (%p297) target = $region44
      $region43: #{tpu_custom_call.1} parent=5 // pred_region
        %s300 = ssub.s32 %s15, 2
        // Predicated region
        $region45: #{tpu_custom_call.1} parent=43 // pred_check
          %p301 = pneg %p107
        $region46: #{tpu_custom_call.1} parent=43 // pred_check_branch
          %303 = sbr.rel (%p301) target = $region48
        $region47: #{tpu_custom_call.1} parent=43 // pred_region
          %s304 = sand.u32 %s92, 1
          %s305 = scalar_lea.sflag [#allocation4], %s304
          %s306 = sand.u32 %s92, 1
          %s307 = smul.addr %s306, 8
          %s308 = scalar_lea.vmem [#allocation7], %s307
          %309 = dma.done %s305, 128
        $region48: #{tpu_custom_call.1} parent=43 // pred_fallthru
          _
      $region44: #{tpu_custom_call.1} parent=5 // pred_fallthru
        _
    $region6: #{tpu_custom_call.1} parent=1 // loop_footer
      %s19 = sadd.s32 1, %s15
    $region7: #{tpu_custom_call.1} parent=1 // loop_footer_branch
      %14 = sbr.rel target = $region3
    $region8: #{tpu_custom_call.1} parent=1 // loop_exit
      _
    %310 = vsyncpa [#allocation3], 1
    %s311 = scalar_lea.sflag [#allocation3], 1
    %312 = vsyncpa %s311, 1
    %313 = vsyncpa [#allocation6], 1
    %314 = vsyncpa [#allocation4], 1
    %s315 = scalar_lea.sflag [#allocation4], 1
    %316 = vsyncpa %s315, 1

</llo_original>
